<compile_context>
chip_gen: v6e
topology: v6e:2x2x1
jax: 0.10.0
libtpu: 0.0.40
codegen_flags: <defaults>
</compile_context>

<pallas_src>
import jax
import jax.numpy as jnp
from jax.experimental import pallas as pl
from jax.experimental.pallas import tpu as pltpu

LANE = 128
DEFAULT_TILE_HW = 8192  # lane-aligned spatial tile cap (per-generation tunable)


# ----------------------------- Pallas kernel --------------------------------

def proposal_head_kernel(w_ref, b_ref, x_ref, m_ref, o_ref):
    # w_ref: (C_out, C_in)    block-diagonal dense grouped-conv weight (resident)
    # b_ref: (C_out, 1)       bias, f32 (resident)
    # x_ref: (C_in, TILE_HW)  channel-major spatial tile (f32 or bf16)
    # m_ref: (1, TILE_HW)     proposal mask, broadcast over output channels
    # o_ref: (C_out, TILE_HW) lane-dense output tile
    acc = jnp.dot(w_ref[...], x_ref[...], preferred_element_type=jnp.float32)
    out = (acc + b_ref[...]) * m_ref[...].astype(jnp.float32)
    o_ref[...] = jax.nn.sigmoid(out).astype(o_ref.dtype)


def _pick_tile_hw(HW, N, tile_hw):
    """Lane-aligned spatial tile; big to amortize grid-step overhead, >=2 blocks for v7x."""
    if HW <= LANE:
        return HW                     # full-extent block (block dim == array dim is legal)
    if tile_hw is None:
        tile_hw = DEFAULT_TILE_HW
    tile_hw = max(LANE, (min(tile_hw, HW) // LANE) * LANE)
    # v7x megacore: when N == 1 make sure the grid has at least 2 blocks.
    if N == 1 and tile_hw >= HW:
        tile_hw = max(LANE, pl.cdiv(pl.cdiv(HW, 2), LANE) * LANE)
    return tile_hw


def proposal_head_pallas(x, mask, w_dense, bias, *, tile_hw=None, x_buffers=None):
    """x: (N, C_in, HW), mask: (N, 1, HW), w_dense: (C_out, C_in), bias: (C_out,) f32."""
    N, C_in, HW = x.shape
    C_out = w_dense.shape[0]

    tile_hw = _pick_tile_hw(HW, N, tile_hw)
    grid = (N, pl.cdiv(HW, tile_hw))   # ragged last block handled by masked writeback

    # Weight matches the activation dtype (tiny cast); bias stays f32 for the f32 epilogue.
    w = w_dense.astype(x.dtype)
    b = bias.reshape(C_out, 1).astype(jnp.float32)

    # Explicit scoped-VMEM budget: double-buffered x + mask + out, plus resident w/b,
    # with 2x headroom. Covers v5e's 16 MiB default; well under v7x's 64 MiB physical.
    needed = (2 * (C_in * tile_hw * x.dtype.itemsize
                   + tile_hw * mask.dtype.itemsize
                   + C_out * tile_hw * x.dtype.itemsize)
              + C_out * C_in * x.dtype.itemsize + C_out * 4)
    vmem_limit = int(min(max(2 * needed, 32 << 20), 48 << 20))

    # Optional deeper x pipelining (v7x tunable; compute per tile is near-zero so DMA
    # issue latency is exposed — a 3rd buffer keeps the copy queue full).
    x_spec_kwargs = {}
    if x_buffers is not None:
        x_spec_kwargs["pipeline_mode"] = pl.Buffered(x_buffers)

    out = pl.pallas_call(
        proposal_head_kernel,
        out_shape=jax.ShapeDtypeStruct((N, C_out, HW), x.dtype),
        grid_spec=pltpu.PrefetchScalarGridSpec(
            num_scalar_prefetch=0,
            grid=grid,
            in_specs=[
                pl.BlockSpec((C_out, C_in), lambda n, j: (0, 0)),
                pl.BlockSpec((C_out, 1), lambda n, j: (0, 0)),
                pl.BlockSpec((None, C_in, tile_hw), lambda n, j: (n, 0, j),
                             **x_spec_kwargs),
                pl.BlockSpec((None, 1, tile_hw), lambda n, j: (n, 0, j)),
            ],
            out_specs=pl.BlockSpec((None, C_out, tile_hw), lambda n, j: (n, 0, j)),
        ),
        compiler_params=pltpu.CompilerParams(
            dimension_semantics=("parallel", "parallel"),
            vmem_limit_bytes=vmem_limit,
        ),
    )(w, b, x, mask)
    return out


# --------------------------- Module-level wrapper ----------------------------

def make_dense_weight(weight, groups):
    """(C_out, C_in//groups) grouped 1x1-conv weight -> dense block-diagonal (C_out, C_in).

    Built once at init time, not per forward call."""
    C_out = weight.shape[0]
    cout_g = C_out // groups
    blocks = [weight[g * cout_g:(g + 1) * cout_g, :] for g in range(groups)]
    return jax.scipy.linalg.block_diag(*blocks).astype(jnp.float32)


def proposal_head_forward(vis_input, mask, w_dense, bias, *, tile_hw=None, x_buffers=None):
    """vis_input: (N, C_in, H, W) NCHW (f32 or bf16), mask: (N, 1, H, W).

    w_dense: (C_out, C_in) dense block-diagonal weight from make_dense_weight.
    bias:    (C_out,)
    Returns (sigmoid(conv(vis_input) * mask), mask); output dtype follows vis_input.
    """
    N, C_in, H, W = vis_input.shape
    C_out = w_dense.shape[0]

    # NCHW is already channel-major: pure (free) reshapes, no transposes, no dtype casts
    # of the dominant tensor.
    x = vis_input.reshape(N, C_in, H * W)
    m = mask.reshape(N, 1, H * W)

    out = proposal_head_pallas(x, m, w_dense, bias.astype(jnp.float32),
                               tile_hw=tile_hw, x_buffers=x_buffers)
    return out.reshape(N, C_out, H, W), mask


# ------------------------------ Reference (JAX) ------------------------------

def proposal_head_reference(vis_input, mask, weight, bias, groups):
    N, C_in, H, W = vis_input.shape
    C_out = weight.shape[0]
    cin_g = C_in // groups
    cout_g = C_out // groups
    x = vis_input.astype(jnp.float32).reshape(N, groups, cin_g, H * W)
    w = weight.reshape(groups, cout_g, cin_g)
    conv = jnp.einsum("ngci,goc->ngoi", x, w).reshape(N, C_out, H, W)
    conv = conv + bias.reshape(1, C_out, 1, 1)
    return jax.nn.sigmoid(conv * mask), mask


# ----------------------------------- Main ------------------------------------

if __name__ == "__main__":
    # cfg: INPUT_SIZE=32, GROUPS=4 -> C_in = 128, OUTPUT_SIZE defaults to groups -> C_out = 4
    INPUT_SIZE = 32
    GROUPS = 4
    OUTPUT_SIZE = GROUPS
    C_IN = INPUT_SIZE * GROUPS
    C_OUT = OUTPUT_SIZE
    N, H, W = 2, 16, 16

    key = jax.random.PRNGKey(0)
    kx, kw, kb = jax.random.split(key, 3)

    vis_input = jax.random.normal(kx, (N, C_IN, H, W), dtype=jnp.float32)

    # deterministic 2D-TAN-style upper-triangular proposal mask (N, 1, H, W)
    rows = jax.lax.broadcasted_iota(jnp.int32, (H, W), 0)
    cols = jax.lax.broadcasted_iota(jnp.int32, (H, W), 1)
    mask2d = (cols >= rows).astype(jnp.float32)
    mask = jnp.broadcast_to(mask2d[None, None, :, :], (N, 1, H, W))

    # Conv2d(C_IN, C_OUT, 1, groups=GROUPS) parameters (deterministic init).
    weight = 0.05 * jax.random.normal(kw, (C_OUT, C_IN // GROUPS), dtype=jnp.float32)
    bias = 0.1 * jax.random.normal(kb, (C_OUT,), dtype=jnp.float32)

    # Init-time work: dense block-diagonal weight built once.
    w_dense = make_dense_weight(weight, GROUPS)

    ref, _ = proposal_head_reference(vis_input, mask, weight, bias, GROUPS)

    # ---- f32 activation path (bit-faithful to the PyTorch module) ----
    out, out_mask = proposal_head_forward(vis_input, mask, w_dense, bias)
    out = jax.block_until_ready(out)
    out_mask = jax.block_until_ready(out_mask)
    assert out.shape == (N, C_OUT, H, W)
    assert out_mask.shape == mask.shape
    assert jnp.max(jnp.abs(out - ref)) < 1e-4

    # ---- bf16 activation path (x reads dominate HBM traffic -> ~1.9x on the roofline) ----
    out_bf16, _ = proposal_head_forward(vis_input.astype(jnp.bfloat16), mask, w_dense, bias)
    out_bf16 = jax.block_until_ready(out_bf16)
    assert jnp.max(jnp.abs(out_bf16.astype(jnp.float32) - ref)) < 2e-2

    # ---- ragged spatial extent + N == 1 (boundary-block masking, megacore split) ----
    N2, H2, W2 = 1, 20, 13
    v2 = jax.random.normal(kx, (N2, C_IN, H2, W2), dtype=jnp.float32)
    m2 = (jax.random.uniform(kb, (N2, 1, H2, W2)) > 0.5).astype(jnp.float32)
    out2, _ = proposal_head_forward(v2, m2, w_dense, bias)
    out2 = jax.block_until_ready(out2)
    ref2, _ = proposal_head_reference(v2, m2, weight, bias, GROUPS)
    assert out2.shape == (N2, C_OUT, H2, W2)
    assert jnp.max(jnp.abs(out2 - ref2)) < 1e-4

    print("KERNEL_OK")
</pallas_src>

<mosaic_0001>
module attributes {stable_mosaic.version = 11 : i64} {
  func.func @proposal_head_kernel(%arg0: i32, %arg1: i32, %arg2: memref<4x128xf32, #tpu.memory_space<vmem>>, %arg3: memref<4x1xf32, #tpu.memory_space<vmem>>, %arg4: memref<1x128x256xf32, #tpu.memory_space<vmem>>, %arg5: memref<1x1x256xf32, #tpu.memory_space<vmem>>, %arg6: memref<1x4x256xf32, #tpu.memory_space<vmem>>) attributes {dimension_semantics = [#tpu.dimension_semantics<parallel>, #tpu.dimension_semantics<parallel>], iteration_bounds = array<i64: 2, 1>, scalar_prefetch = 0 : i64, scratch_operands = 0 : i64, tpu.core_type = #tpu.core_type<tc>, window_params = [{pipeline_mode = #tpu.pipeline_mode<synchronous>, transform_indices = @transform_0, window_bounds = array<i64: 4, 128>}, {pipeline_mode = #tpu.pipeline_mode<synchronous>, transform_indices = @transform_1, window_bounds = array<i64: 4, 1>}, {transform_indices = @transform_2, window_bounds = array<i64: 1, 128, 256>}, {transform_indices = @transform_3, window_bounds = array<i64: 1, 1, 256>}, {transform_indices = @transform_4, window_bounds = array<i64: 1, 4, 256>}]} {
    %c0 = arith.constant 0 : index
    %c0_0 = arith.constant 0 : index
    %0 = vector.load %arg2[%c0, %c0_0] : memref<4x128xf32, #tpu.memory_space<vmem>>, vector<4x128xf32>
    %c0_1 = arith.constant 0 : index
    %c0_2 = arith.constant 0 : index
    %c0_3 = arith.constant 0 : index
    %1 = vector.load %arg4[%c0_1, %c0_2, %c0_3] : memref<1x128x256xf32, #tpu.memory_space<vmem>>, vector<1x128x256xf32>
    %2 = vector.shape_cast %1 : vector<1x128x256xf32> to vector<128x256xf32>
    %cst = arith.constant dense<0.000000e+00> : vector<4x256xf32>
    %3 = tpu.matmul %0, %2, %cst {dimension_numbers = #tpu.dot_dimension_numbers<[1], [0], [0], [1], [0, 0, 1, 1], [], []>} : vector<4x128xf32>, vector<128x256xf32>, vector<4x256xf32> -> vector<4x256xf32>
    %c0_4 = arith.constant 0 : index
    %c0_5 = arith.constant 0 : index
    %4 = vector.load %arg3[%c0_4, %c0_5] : memref<4x1xf32, #tpu.memory_space<vmem>>, vector<4x1xf32>
    %5 = vector.broadcast %4 : vector<4x1xf32> to vector<4x256xf32>
    %6 = arith.addf %3, %5 : vector<4x256xf32>
    %c0_6 = arith.constant 0 : index
    %c0_7 = arith.constant 0 : index
    %c0_8 = arith.constant 0 : index
    %7 = vector.load %arg5[%c0_6, %c0_7, %c0_8] : memref<1x1x256xf32, #tpu.memory_space<vmem>>, vector<1x1x256xf32>
    %8 = vector.shape_cast %7 : vector<1x1x256xf32> to vector<1x256xf32>
    %9 = vector.broadcast %8 : vector<1x256xf32> to vector<4x256xf32>
    %10 = arith.mulf %6, %9 : vector<4x256xf32>
    %11 = arith.negf %10 : vector<4x256xf32>
    %12 = math.exp %11 : vector<4x256xf32>
    %cst_9 = arith.constant 1.000000e+00 : f32
    %13 = vector.broadcast %cst_9 : f32 to vector<4x256xf32>
    %14 = arith.addf %13, %12 : vector<4x256xf32>
    %15 = arith.divf %13, %14 : vector<4x256xf32>
    %c0_10 = arith.constant 0 : index
    %c0_11 = arith.constant 0 : index
    %c0_12 = arith.constant 0 : index
    %16 = vector.load %arg6[%c0_10, %c0_11, %c0_12] : memref<1x4x256xf32, #tpu.memory_space<vmem>>, vector<1x4x256xf32>
    %17 = vector.shape_cast %16 : vector<1x4x256xf32> to vector<4x256xf32>
    %18 = vector.shape_cast %15 : vector<4x256xf32> to vector<1x4x256xf32>
    tpu.vector_store %arg6[%c0_10, %c0_11, %c0_12], %18 {strides = array<i32>} : memref<1x4x256xf32, #tpu.memory_space<vmem>>, vector<1x4x256xf32>,
    return
  }
  func.func @transform_0(%arg0: i32, %arg1: i32) -> (i32, i32) {
    %c0_i32 = arith.constant 0 : i32
    %c0_i32_0 = arith.constant 0 : i32
    %c0_i32_1 = arith.constant 0 : i32
    return %c0_i32, %c0_i32_0 : i32, i32
  }
  func.func @transform_1(%arg0: i32, %arg1: i32) -> (i32, i32) {
    %c0_i32 = arith.constant 0 : i32
    %c0_i32_0 = arith.constant 0 : i32
    %c0_i32_1 = arith.constant 0 : i32
    return %c0_i32, %c0_i32_0 : i32, i32
  }
  func.func @transform_2(%arg0: i32, %arg1: i32) -> (i32, i32, i32) {
    %c0_i32 = arith.constant 0 : i32
    %c0_i32_0 = arith.constant 0 : i32
    return %arg0, %c0_i32, %arg1 : i32, i32, i32
  }
  func.func @transform_3(%arg0: i32, %arg1: i32) -> (i32, i32, i32) {
    %c0_i32 = arith.constant 0 : i32
    %c0_i32_0 = arith.constant 0 : i32
    return %arg0, %c0_i32, %arg1 : i32, i32, i32
  }
  func.func @transform_4(%arg0: i32, %arg1: i32) -> (i32, i32, i32) {
    %c0_i32 = arith.constant 0 : i32
    %c0_i32_0 = arith.constant 0 : i32
    return %arg0, %c0_i32, %arg1 : i32, i32, i32
  }
}

</mosaic_0001>

<llo_original>
// kernel: tpu_custom_call.1
$region0: #{tpu_custom_call.1}
  #allocation0 [shape = 'u32[]', space=smem, size = 0x4, offset = 0x4, fixed_abs, tag = 'smem constant byte address 0x4 - core index']
  #allocation1 [shape = 'u32[144,128]{1,0:T(1,128)}', space=vmem, size = 0x12000, scoped, tag = 'internal scratch']
  %s0 = inlined_call_operand.vmem [shape: f32[4,128], index: 0, kind: input, shape index: {}]
  %s1 = inlined_call_operand.vmem [shape: f32[4,1], index: 1, kind: input, shape index: {}]
  %s2 = inlined_call_operand.hbm [shape: f32[2,128,256], index: 2, kind: input, shape index: {}]
  %s3 = inlined_call_operand.vmem [shape: f32[2,1,256], index: 3, kind: input, shape index: {}]
  %s4 = inlined_call_operand.hbm [shape: f32[2,4,256], index: 4, kind: output, shape index: {}]
  %s5 = sld [smem:[#allocation0]]
  $region53: #{tpu_custom_call.1} parent=0
    _
  %s7 = ssub.s32 1, %s5
  %s8 = scalar_select 0, %s7, %s5
  $region1: #{tpu_custom_call.1} parent=0
    #allocation2 [shape = 'u8[262144]{0}', space=vmem, size = 0x40000, scoped, tag = 'input window, operand 2']
    #allocation3 [shape = 's32[2]{0}', space=sflag, size = 0x8, scoped, tag = 'scoped memory for tpu_custom_call.1']
    #allocation4 [shape = 's32[2]{0}', space=sflag, size = 0x8, scoped, tag = 'scoped memory for tpu_custom_call.1']
    #allocation5 [shape = 'u8[8192]{0}', space=vmem, size = 0x2000, scoped, tag = 'output window, operand 0']
    %9 = vsyncpa [#allocation3], 0
    %s10 = scalar_lea.sflag [#allocation3], 1
    %11 = vsyncpa %s10, 0
    %12 = vsyncpa [#allocation4], 0
    %s13 = scalar_lea.sflag [#allocation4], 1
    %14 = vsyncpa %s13, 0
    loop: start=0, step=1, limit=4
    $region2: #{tpu_custom_call.1} parent=1 // loop_pre_header
      _
    $region3: #{tpu_custom_call.1} parent=1 // loop_header
      %s16 = sphi 0, %s20
      %p17 = scmp.ge.s32.totalorder %s16, 4
      %s23 = sphi 0, %s35
      %s24 = sphi 0, %s31
      %s25 = sphi 0, %s23
      %s26 = sphi 0, %s24
      %s27 = sphi 0, %s25
      %s28 = sphi 0, %s26
      %s36 = sphi 0, %s36
      %s38 = sphi 0, %s36
      %s39 = sphi 0, %s38
      %s53 = sphi 0, %s39
      %s57 = sphi 0, %s57
      %s59 = sphi 0, %s57
      %s60 = sphi 0, %s59
      %s74 = sphi 0, %s60
      %s82 = sphi 0, %s84
      %s85 = sphi 0, %s82
      %s86 = sphi 0, %s85
      %s102 = sphi 0, %s86
      %s110 = sphi 0, %s112
      %s113 = sphi 0, %s110
      %s114 = sphi 0, %s113
      %s130 = sphi 0, %s114
      %s138 = sphi 0, %s140
      %s141 = sphi 0, %s138
      %s142 = sphi 0, %s141
      %s158 = sphi 0, %s142
    $region4: #{tpu_custom_call.1} parent=1 // loop_header_branch
      %19 = sbr.rel (%p17) target = $region8
    $region5: #{tpu_custom_call.1} parent=1 // loop_body
      %s21 = ssub.s32 %s16, 1
      %s22 = ssub.s32 %s16, 2
      %s29 = sadd.s32 1, %s24
      %p30 = scmp.ge.s32.totalorder %s29, 1
      %s31 = scalar_select %p30, 0, %s29
      %s32 = sadd.s32 1, %s23
      %s33 = scalar_select %p30, %s32, %s23
      %p34 = scmp.ge.s32.totalorder %s33, 2
      %s35 = scalar_select %p34, 0, %s33
      %s37 = sadd.s32 %s36, 1
      %p40 = scmp.eq.s32.totalorder %s16, 1
      %p41 = scmp.ne.s32.totalorder %s36, %s38
      %p42 = scmp.eq.s32.totalorder %s16, 0
      %p43 = por %p41, %p42
      %p44 = scmp.ne.s32.totalorder %s36, %s38
      %p45 = scmp.eq.s32.totalorder %s21, 1
      %p46 = por %p44, %p45
      %p47 = scmp.ne.s32.totalorder %s38, %s39
      %p48 = scmp.eq.s32.totalorder %s21, 0
      %p49 = por %p47, %p48
      %p50 = scmp.ne.s32.totalorder %s38, %s39
      %p51 = scmp.eq.s32.totalorder %s22, 1
      %p52 = por %p50, %p51
      %p54 = scmp.ne.s32.totalorder %s39, %s53
      %p55 = scmp.eq.s32.totalorder %s22, 0
      %p56 = por %p54, %p55
      %s58 = sadd.s32 %s57, 1
      %p61 = scmp.eq.s32.totalorder %s16, 1
      %p62 = scmp.ne.s32.totalorder %s57, %s59
      %p63 = scmp.eq.s32.totalorder %s16, 0
      %p64 = por %p62, %p63
      %p65 = scmp.ne.s32.totalorder %s57, %s59
      %p66 = scmp.eq.s32.totalorder %s21, 1
      %p67 = por %p65, %p66
      %p68 = scmp.ne.s32.totalorder %s59, %s60
      %p69 = scmp.eq.s32.totalorder %s21, 0
      %p70 = por %p68, %p69
      %p71 = scmp.ne.s32.totalorder %s59, %s60
      %p72 = scmp.eq.s32.totalorder %s22, 1
      %p73 = por %p71, %p72
      %p75 = scmp.ne.s32.totalorder %s60, %s74
      %p76 = scmp.eq.s32.totalorder %s22, 0
      %p77 = por %p75, %p76
      %s78 = ssub.s32 %s23, %s35
      %s79 = ssub.s32 %s24, %s31
      %s80 = sor.u32 %s78, %s79
      %p81 = scmp.eq.s32.totalorder %s80, 0
      %s83 = sadd.s32 %s82, 1
      %s84 = scalar_select %p81, %s82, %s83
      %p87 = pneg %p81
      %p88 = scmp.eq.s32.totalorder %s16, 1
      %p89 = por %p87, %p88
      %p90 = scmp.ne.s32.totalorder %s82, %s85
      %p91 = scmp.eq.s32.totalorder %s16, 0
      %p92 = por %p90, %p91
      %p93 = scmp.ne.s32.totalorder %s82, %s85
      %p94 = scmp.eq.s32.totalorder %s21, 1
      %p95 = por %p93, %p94
      %p96 = scmp.ne.s32.totalorder %s85, %s86
      %p97 = scmp.eq.s32.totalorder %s21, 0
      %p98 = por %p96, %p97
      %p99 = scmp.ne.s32.totalorder %s85, %s86
      %p100 = scmp.eq.s32.totalorder %s22, 1
      %p101 = por %p99, %p100
      %p103 = scmp.ne.s32.totalorder %s86, %s102
      %p104 = scmp.eq.s32.totalorder %s22, 0
      %p105 = por %p103, %p104
      %s106 = ssub.s32 %s23, %s35
      %s107 = ssub.s32 %s24, %s31
      %s108 = sor.u32 %s106, %s107
      %p109 = scmp.eq.s32.totalorder %s108, 0
      %s111 = sadd.s32 %s110, 1
      %s112 = scalar_select %p109, %s110, %s111
      %p115 = pneg %p109
      %p116 = scmp.eq.s32.totalorder %s16, 1
      %p117 = por %p115, %p116
      %p118 = scmp.ne.s32.totalorder %s110, %s113
      %p119 = scmp.eq.s32.totalorder %s16, 0
      %p120 = por %p118, %p119
      %p121 = scmp.ne.s32.totalorder %s110, %s113
      %p122 = scmp.eq.s32.totalorder %s21, 1
      %p123 = por %p121, %p122
      %p124 = scmp.ne.s32.totalorder %s113, %s114
      %p125 = scmp.eq.s32.totalorder %s21, 0
      %p126 = por %p124, %p125
      %p127 = scmp.ne.s32.totalorder %s113, %s114
      %p128 = scmp.eq.s32.totalorder %s22, 1
      %p129 = por %p127, %p128
      %p131 = scmp.ne.s32.totalorder %s114, %s130
      %p132 = scmp.eq.s32.totalorder %s22, 0
      %p133 = por %p131, %p132
      %s134 = ssub.s32 %s23, %s35
      %s135 = ssub.s32 %s24, %s31
      %s136 = sor.u32 %s134, %s135
      %p137 = scmp.eq.s32.totalorder %s136, 0
      %s139 = sadd.s32 %s138, 1
      %s140 = scalar_select %p137, %s138, %s139
      %p143 = pneg %p137
      %p144 = scmp.eq.s32.totalorder %s16, 1
      %p145 = por %p143, %p144
      %p146 = scmp.ne.s32.totalorder %s138, %s141
      %p147 = scmp.eq.s32.totalorder %s16, 0
      %p148 = por %p146, %p147
      %p149 = scmp.ne.s32.totalorder %s138, %s141
      %p150 = scmp.eq.s32.totalorder %s21, 1
      %p151 = por %p149, %p150
      %p152 = scmp.ne.s32.totalorder %s141, %s142
      %p153 = scmp.eq.s32.totalorder %s21, 0
      %p154 = por %p152, %p153
      %p155 = scmp.ne.s32.totalorder %s141, %s142
      %p156 = scmp.eq.s32.totalorder %s22, 1
      %p157 = por %p155, %p156
      %p159 = scmp.ne.s32.totalorder %s142, %s158
      %p160 = scmp.eq.s32.totalorder %s22, 0
      %p161 = por %p159, %p160
      %p162 = scmp.le.s32.totalorder 1, %s16
      %p163 = scmp.lt.s32.totalorder %s16, 3
      %p164 = pnand %p162, %p163
      %p165 = pneg %p164
      // Predicated region
      $region9: #{tpu_custom_call.1} parent=5 // pred_check
        _
      $region10: #{tpu_custom_call.1} parent=5 // pred_check_branch
        %167 = sbr.rel (%p164) target = $region12
      $region11: #{tpu_custom_call.1} parent=5 // pred_region
        %s168 = ssub.s32 %s16, 1
        // Predicated region
        $region13: #{tpu_custom_call.1} parent=11 // pred_check
          %p169 = pneg %p49
        $region14: #{tpu_custom_call.1} parent=11 // pred_check_branch
          %171 = sbr.rel (%p169) target = $region16
        $region15: #{tpu_custom_call.1} parent=11 // pred_region
          _
        $region16: #{tpu_custom_call.1} parent=11 // pred_fallthru
          _
        // Predicated region
        $region17: #{tpu_custom_call.1} parent=11 // pred_check
          %p172 = pneg %p70
        $region18: #{tpu_custom_call.1} parent=11 // pred_check_branch
          %174 = sbr.rel (%p172) target = $region20
        $region19: #{tpu_custom_call.1} parent=11 // pred_region
          _
        $region20: #{tpu_custom_call.1} parent=11 // pred_fallthru
          _
      $region12: #{tpu_custom_call.1} parent=5 // pred_fallthru
        _
      %p175 = scmp.lt.s32.totalorder %s16, 2
      // Predicated region
      $region21: #{tpu_custom_call.1} parent=5 // pred_check
        %p176 = pneg %p175
      $region22: #{tpu_custom_call.1} parent=5 // pred_check_branch
        %178 = sbr.rel (%p176) target = $region24
      $region23: #{tpu_custom_call.1} parent=5 // pred_region
        // Predicated region
        $region25: #{tpu_custom_call.1} parent=23 // pred_check
          %p179 = pneg %p92
        $region26: #{tpu_custom_call.1} parent=23 // pred_check_branch
          %181 = sbr.rel (%p179) target = $region28
        $region27: #{tpu_custom_call.1} parent=23 // pred_region
          %s182 = sand.u32 %s82, 1
          %s183 = scalar_lea.sflag [#allocation3], %s182
          %s184 = sand.u32 %s82, 1
          %s185 = smul.addr %s184, 256
          %s186 = scalar_lea.vmem [#allocation2], %s185
          %s187 = smul.u32 2, %s24
          %s189 = ssub.s32 4096, 4096
          %190 = vsyncadd %s183, %s189
          %s191 = smul.addr %s23, 32
          %s192 = sadd.s32 %s187, %s191
          %s193 = smul.addr %s192, 128
          %s194 = scalar_lea.hbm %s2, %s193
          %s195 = sshll.u32 %s186, 4
          %s196 = int_to_ptr.vmem [resolvable:$true] %s195
          %201 = dma.hbm_to_vmem [thread:$0]  %s194, 4096, %s196, %s183, 256, 256, 16
        $region28: #{tpu_custom_call.1} parent=23 // pred_fallthru
          _
        // Predicated region
        $region29: #{tpu_custom_call.1} parent=23 // pred_check
          %p202 = pneg %p120
        $region30: #{tpu_custom_call.1} parent=23 // pred_check_branch
          %204 = sbr.rel (%p202) target = $region32
        $region31: #{tpu_custom_call.1} parent=23 // pred_region
          %s205 = smul.u32 2, %s24
          %p206 = scmp.lt.s32.totalorder %s23, 1
          %s207 = scalar_select %p206, %s23, 1
          %p208 = scmp.lt.s32.totalorder %s205, 1
          %s209 = scalar_select %p208, %s205, 1
          %s210 = smul.addr %s207, 2
          %s211 = sadd.s32 %s209, %s210
          %s212 = scalar_lea.vmem %s3, %s211
          %s213 = smul.u32 2, %s24
        $region32: #{tpu_custom_call.1} parent=23 // pred_fallthru
          _
      $region24: #{tpu_custom_call.1} parent=5 // pred_fallthru
        _
      %p214 = scmp.le.s32.totalorder 1, %s16
      %p215 = scmp.lt.s32.totalorder %s16, 3
      %p216 = pnand %p214, %p215
      %p217 = pneg %p216
      // Predicated region
      $region33: #{tpu_custom_call.1} parent=5 // pred_check
        _
      $region34: #{tpu_custom_call.1} parent=5 // pred_check_branch
        %219 = sbr.rel (%p216) target = $region36
      $region35: #{tpu_custom_call.1} parent=5 // pred_region
        %s220 = ssub.s32 %s16, 1
        %s221 = sand.u32 %s85, 1
        %s222 = scalar_lea.sflag [#allocation3], %s221
        %s223 = sand.u32 %s85, 1
        %s224 = smul.addr %s223, 256
        %s225 = scalar_lea.vmem [#allocation2], %s224
        // Predicated region
        $region37: #{tpu_custom_call.1} parent=35 // pred_check
          %p226 = pneg %p98
        $region38: #{tpu_custom_call.1} parent=35 // pred_check_branch
          %228 = sbr.rel (%p226) target = $region40
        $region39: #{tpu_custom_call.1} parent=35 // pred_region
          %229 = dma.done %s222, 4096
        $region40: #{tpu_custom_call.1} parent=35 // pred_fallthru
          _
        %p230 = pneg %p49
        %p231 = pneg %p46
        %p232 = pneg %p70
        %p233 = pneg %p67
        %s234 = sand.u32 %s85, 1
        %s235 = scalar_lea.sflag [#allocation3], %s234
        %s236 = sand.u32 %s85, 1
        %s237 = smul.addr %s236, 256
        %s238 = scalar_lea.vmem [#allocation2], %s237
        %p239 = pneg %p98
        %p240 = pneg %p95
        %s241 = smul.u32 2, %s26
        %p242 = scmp.lt.s32.totalorder %s25, 1
        %s243 = scalar_select %p242, %s25, 1
        %p244 = scmp.lt.s32.totalorder %s241, 1
        %s245 = scalar_select %p244, %s241, 1
        %s246 = smul.addr %s243, 2
        %s247 = sadd.s32 %s245, %s246
        %s248 = scalar_lea.vmem %s3, %s247
        %p249 = pneg %p126
        %p250 = pneg %p123
        %p251 = pneg %p154
        %p252 = pneg %p151
        %s253 = sand.u32 %s141, 1
        %s254 = scalar_lea.sflag [#allocation4], %s253
        %s255 = sand.u32 %s141, 1
        %s256 = smul.addr %s255, 8
        %s257 = scalar_lea.vmem [#allocation5], %s256
        %s258 = smul.u32 2, %s26
        %s259 = smul.u32 2, %s26
        %p260 = scmp.lt.s32.totalorder %s25, 1
        %s261 = scalar_select %p260, %s25, 1
        %p262 = scmp.lt.s32.totalorder %s259, 1
        %s263 = scalar_select %p262, %s259, 1
        %s264 = smul.addr %s261, 2
        %s265 = sadd.s32 %s263, %s264
        %s266 = scalar_lea.vmem %s3, %s265
        %s267 = smul.u32 2, %s26
        %s268 = smul.u32 2, %s26
        %v269 = vld [vmem:[%s0] sm:$0xf]
        %v270 = vld [vmem:[%s225] sm:$0xff]
        %v271 = vld [vmem:[%s225 + $0x8] sm:$0xff]
        %v272 = vld [vmem:[%s225 + $0x10] sm:$0xff]
        %v273 = vld [vmem:[%s225 + $0x18] sm:$0xff]
        %v274 = vld [vmem:[%s225 + $0x20] sm:$0xff]
        %v275 = vld [vmem:[%s225 + $0x28] sm:$0xff]
        %v276 = vld [vmem:[%s225 + $0x30] sm:$0xff]
        %v277 = vld [vmem:[%s225 + $0x38] sm:$0xff]
        %v278 = vld [vmem:[%s225 + $0x40] sm:$0xff]
        %v279 = vld [vmem:[%s225 + $0x48] sm:$0xff]
        %v280 = vld [vmem:[%s225 + $0x50] sm:$0xff]
        %v281 = vld [vmem:[%s225 + $0x58] sm:$0xff]
        %v282 = vld [vmem:[%s225 + $0x60] sm:$0xff]
        %v283 = vld [vmem:[%s225 + $0x68] sm:$0xff]
        %v284 = vld [vmem:[%s225 + $0x70] sm:$0xff]
        %v285 = vld [vmem:[%s225 + $0x78] sm:$0xff]
        %v286 = vld [vmem:[%s225 + $0x80] sm:$0xff]
        %v287 = vld [vmem:[%s225 + $0x88] sm:$0xff]
        %v288 = vld [vmem:[%s225 + $0x90] sm:$0xff]
        %v289 = vld [vmem:[%s225 + $0x98] sm:$0xff]
        %v290 = vld [vmem:[%s225 + $0xa0] sm:$0xff]
        %v291 = vld [vmem:[%s225 + $0xa8] sm:$0xff]
        %v292 = vld [vmem:[%s225 + $0xb0] sm:$0xff]
        %v293 = vld [vmem:[%s225 + $0xb8] sm:$0xff]
        %v294 = vld [vmem:[%s225 + $0xc0] sm:$0xff]
        %v295 = vld [vmem:[%s225 + $0xc8] sm:$0xff]
        %v296 = vld [vmem:[%s225 + $0xd0] sm:$0xff]
        %v297 = vld [vmem:[%s225 + $0xd8] sm:$0xff]
        %v298 = vld [vmem:[%s225 + $0xe0] sm:$0xff]
        %v299 = vld [vmem:[%s225 + $0xe8] sm:$0xff]
        %v300 = vld [vmem:[%s225 + $0xf0] sm:$0xff]
        %v301 = vld [vmem:[%s225 + $0xf8] sm:$0xff]
        %v302 = vld [vmem:[%s1] sm:$0xf]
        %304 = vset.pattern.permute.xlu0 0
        %305 = vperm.xlu0 %304, %v302
        %v306 = vpop.permute.xlu0 %305
        %308 = vmatprep.subr.mxu0 %v301
        %309 = vmatpush1.msra.mxu0 %v300
        %310 = vmatprep.subr.mxu0 %v299
        %311 = vmatpush1.msra.mxu0 %v298
        %312 = vmatprep.subr.mxu0 %v297
        %313 = vmatpush1.msra.mxu0 %v296
        %314 = vmatprep.subr.mxu0 %v295
        %315 = vmatpush1.msra.mxu0 %v294
        %316 = vmatprep.subr.mxu0 %v293
        %317 = vmatpush1.msra.mxu0 %v292
        %318 = vmatprep.subr.mxu0 %v291
        %319 = vmatpush1.msra.mxu0 %v290
        %320 = vmatprep.subr.mxu0 %v289
        %321 = vmatpush1.msra.mxu0 %v288
        %322 = vmatprep.subr.mxu0 %v287
        %323 = vmatpush1.msra.mxu0 %v286
        %324 = vmatprep.subr.mxu0 %v285
        %325 = vmatpush1.msra.mxu0 %v284
        %326 = vmatprep.subr.mxu0 %v283
        %327 = vmatpush1.msra.mxu0 %v282
        %328 = vmatprep.subr.mxu0 %v281
        %329 = vmatpush1.msra.mxu0 %v280
        %330 = vmatprep.subr.mxu0 %v279
        %331 = vmatpush1.msra.mxu0 %v278
        %332 = vmatprep.subr.mxu0 %v277
        %333 = vmatpush1.msra.mxu0 %v276
        %334 = vmatprep.subr.mxu0 %v275
        %335 = vmatpush1.msra.mxu0 %v274
        %336 = vmatprep.subr.mxu0 %v273
        %337 = vmatpush1.msra.mxu0 %v272
        %338 = vmatprep.subr.mxu0 %v271
        %339 = vmatpush1.msra.mxu0 %v270
        %340 = vmatprep.subr.mxu0 0.0
        %341 = vmatpush2.msra.mxu0 0.0
        %342 = vmatprep.subr.mxu0 0.0
        %343 = vmatpush2.msra.mxu0 0.0
        %344 = vmatprep.subr.mxu0 0.0
        %345 = vmatpush2.msra.mxu0 0.0
        %346 = vmatprep.subr.mxu0 0.0
        %347 = vmatpush2.msra.mxu0 0.0
        %348 = vmatprep.subr.mxu0 0.0
        %349 = vmatpush2.msra.mxu0 0.0
        %350 = vmatprep.subr.mxu0 0.0
        %351 = vmatpush2.msra.mxu0 0.0
        %352 = vmatprep.subr.mxu0 0.0
        %353 = vmatpush2.msra.mxu0 0.0
        %354 = vmatprep.subr.mxu0 0.0
        %355 = vmatpush2.msra.mxu0 0.0
        %356 = vmatprep.subr.mxu0 0.0
        %357 = vmatpush2.msra.mxu0 0.0
        %358 = vmatprep.subr.mxu0 0.0
        %359 = vmatpush2.msra.mxu0 0.0
        %360 = vmatprep.subr.mxu0 0.0
        %361 = vmatpush2.msra.mxu0 0.0
        %362 = vmatprep.subr.mxu0 0.0
        %363 = vmatpush2.msra.mxu0 0.0
        %364 = vmatprep.subr.mxu0 0.0
        %365 = vmatpush2.msra.mxu0 0.0
        %366 = vmatprep.subr.mxu0 0.0
        %367 = vmatpush2.msra.mxu0 0.0
        %368 = vmatprep.subr.mxu0 0.0
        %369 = vmatpush2.msra.mxu0 0.0
        %370 = vmatprep.subr.mxu0 0.0
        %371 = vmatpush2.msra.mxu0 0.0
        %372 = vmatprep.mubr.f32.mxu0 0.0
        %373 = vmatmul.mubr.f32.gmra.mxu0 %v269
        %v374 = vpop.f32.mrf.mxu0
        %v375 = vadd.f32 %v306, %v374
        %v376 = vpop.f32.mrf.mxu0
        %v377 = vadd.f32 %v306, %v376
        %378 = vdwg.mxu0
        %v379 = vld [vmem:[%s266] sm:$0x3]
        %v381 = vlaneseq
        %v382 = vshrl.u32 %v381, 7
        %v383 = vsub.s32 0, %v382
        %v384 = vrot.slane %v379, %v383
        %v385 = vlaneseq
        %v386 = vshrl.u32 %v385, 7
        %v387 = vsub.s32 1, %v386
        %v388 = vrot.slane %v379, %v387
        %v391 = vmul.f32 %v375, %v384
        %v392 = vmul.f32 %v377, %v388
        %v393 = vxor.u32 %v391, 2147483648
        %v394 = vxor.u32 %v392, 2147483648
        %v395 = vmul.f32 %v393, 1.442695
        %v396 = vpow.pop %v395
        %v397 = vmul.f32 %v394, 1.442695
        %v398 = vpow.pop %v397
        %v399 = vadd.f32 %v396, 1.0
        %v400 = vadd.f32 %v398, 1.0
        %v401 = vrcp.pop %v399
        %v402 = vmul.f32 1.0, %v401
        %v403 = vrcp.pop %v400
        %v404 = vmul.f32 1.0, %v403
        %v407 = vcombine.low %v402, %v404
        %409 = vst [vmem:[%s257] sm:$0xff] %v407
        %s410 = sand.u32 %s141, 1
        %s411 = scalar_lea.sflag [#allocation4], %s410
        %s412 = sand.u32 %s141, 1
        %s413 = smul.addr %s412, 8
        %s414 = scalar_lea.vmem [#allocation5], %s413
        // Predicated region
        $region41: #{tpu_custom_call.1} parent=35 // pred_check
          %p415 = pneg %p151
        $region42: #{tpu_custom_call.1} parent=35 // pred_check_branch
          %417 = sbr.rel (%p415) target = $region44
        $region43: #{tpu_custom_call.1} parent=35 // pred_region
          %s418 = smul.u32 2, %s26
          %s420 = ssub.s32 128, 128
          %421 = vsyncadd %s411, %s420
          %s422 = smul.addr %s25, 2
          %s423 = sadd.s32 %s418, %s422
          %s424 = smul.addr %s423, 64
          %s425 = scalar_lea.hbm %s4, %s424
          %s427 = sshll.u32 %s414, 4
          %s428 = int_to_ptr.vmem [resolvable:$true] %s427
          %430 = dma.vmem_to_hbm [thread:$0]  %s428, 128, %s425, %s411
        $region44: #{tpu_custom_call.1} parent=35 // pred_fallthru
          _
      $region36: #{tpu_custom_call.1} parent=5 // pred_fallthru
        _
      %p431 = scmp.le.s32.totalorder 2, %s16
      // Predicated region
      $region45: #{tpu_custom_call.1} parent=5 // pred_check
        %p432 = pneg %p431
      $region46: #{tpu_custom_call.1} parent=5 // pred_check_branch
        %434 = sbr.rel (%p432) target = $region48
      $region47: #{tpu_custom_call.1} parent=5 // pred_region
        %s435 = ssub.s32 %s16, 2
        // Predicated region
        $region49: #{tpu_custom_call.1} parent=47 // pred_check
          %p436 = pneg %p157
        $region50: #{tpu_custom_call.1} parent=47 // pred_check_branch
          %438 = sbr.rel (%p436) target = $region52
        $region51: #{tpu_custom_call.1} parent=47 // pred_region
          %s439 = sand.u32 %s142, 1
          %s440 = scalar_lea.sflag [#allocation4], %s439
          %s441 = sand.u32 %s142, 1
          %s442 = smul.addr %s441, 8
          %s443 = scalar_lea.vmem [#allocation5], %s442
          %444 = dma.done %s440, 128
        $region52: #{tpu_custom_call.1} parent=47 // pred_fallthru
          _
      $region48: #{tpu_custom_call.1} parent=5 // pred_fallthru
        _
    $region6: #{tpu_custom_call.1} parent=1 // loop_footer
      %s20 = sadd.s32 1, %s16
    $region7: #{tpu_custom_call.1} parent=1 // loop_footer_branch
      %15 = sbr.rel target = $region3
    $region8: #{tpu_custom_call.1} parent=1 // loop_exit
      _
    %445 = vsyncpa [#allocation3], 1
    %s446 = scalar_lea.sflag [#allocation3], 1
    %447 = vsyncpa %s446, 1
    %448 = vsyncpa [#allocation4], 1
    %s449 = scalar_lea.sflag [#allocation4], 1
    %450 = vsyncpa %s449, 1

</llo_original>
